<compile_context>
chip_gen: v7x
topology: tpu7x:2x2x1
jax: 0.10.0
libtpu: 0.0.40
codegen_flags: <defaults>
</compile_context>

<pallas_src>
import functools

import jax
import jax.numpy as jnp
from jax.experimental import pallas as pl
from jax.experimental.pallas import tpu as pltpu

_LANE = 128


def _round_up(x, m):
    return ((x + m - 1) // m) * m


def _pick_tile(dim, pref, align):
    """Largest tile <= pref that divides `dim` (full dim if dim <= pref).

    `dim` is either <= pref or a multiple of `align` (guaranteed by the
    padding done in prepare/forward), so this never falls back to the full
    dimension for large shapes.
    """
    if dim <= pref:
        return dim
    t = (pref // align) * align
    while t >= align:
        if dim % t == 0:
            return t
        t -= align
    return dim  # unreachable for padded dims; kept as a safety net


# --------------------------------------------------------------------------
# Kernels
# --------------------------------------------------------------------------

def _small_kernel(x_ref, w_ref, b_ref, o_ref):
    """Whole K and whole N_pad in one tile: no scratch, no pl.when.

    Weight and bias are resident (index_map (0,0)); only M is streamed.
    """
    acc = jnp.dot(x_ref[...], w_ref[...], preferred_element_type=jnp.float32)
    o_ref[...] = jnp.maximum(acc + b_ref[...], 0.0).astype(o_ref.dtype)


def _tiled_kernel(x_ref, w_ref, b_ref, o_ref, acc_ref):
    """One (TM, TN) output tile; K is the last ('arbitrary') grid axis."""
    k = pl.program_id(2)

    @pl.when(k == 0)
    def _init():
        acc_ref[...] = jnp.zeros_like(acc_ref)

    # bf16 x bf16 (or f32 x f32) MXU matmul with f32 accumulation.
    acc_ref[...] += jnp.dot(
        x_ref[...], w_ref[...], preferred_element_type=jnp.float32
    )

    @pl.when(k == pl.num_programs(2) - 1)
    def _epilogue():
        out = acc_ref[...] + b_ref[...]          # (TM, TN) + (1, TN) broadcast
        o_ref[...] = jnp.maximum(out, 0.0).astype(o_ref.dtype)


# --------------------------------------------------------------------------
# Parameter prep (one-time, at init — NOT per forward call)
# --------------------------------------------------------------------------

def prepare_aggregation_params(weight, bias, dtype=jnp.bfloat16):
    """weight: (N, K) nn.Linear layout; bias: (N,).

    Returns (w_kn_padded, bias_1n_f32, logical_N):
      w_kn_padded: (K_pad, N_pad), dtype (bf16 by default), N_pad multiple of
                   128; K_pad multiple of 128 when K > 128 (so the reduction
                   grid always has a dividing 128-multiple tile).
      bias_1n_f32: (1, N_pad) float32.
    Zero padding is safe: padded K rows contribute 0 and padded N columns give
    relu(0 + 0) = 0, which the wrapper slices off.
    """
    n, k = weight.shape
    n_pad = _round_up(n, _LANE)
    k_pad = _round_up(k, _LANE) if k > _LANE else k
    w_kn = jnp.zeros((k_pad, n_pad), dtype).at[:k, :n].set(weight.T.astype(dtype))
    b_1n = jnp.zeros((1, n_pad), jnp.float32).at[:, :n].set(bias.astype(jnp.float32))
    return w_kn, b_1n, n


# --------------------------------------------------------------------------
# Forward
# --------------------------------------------------------------------------

@functools.partial(
    jax.jit,
    static_argnames=("out_dim", "tm", "tn", "tk", "out_dtype", "slice_output"),
)
def aggregation_forward(x, w_kn, b_1n, out_dim, *, tm=512, tn=256, tk=512,
                        out_dtype=jnp.float32, slice_output=True):
    """x: (M, K); w_kn: (K_pad, N_pad) prepped weight (bf16); b_1n: (1, N_pad) f32.

    Returns (M, out_dim) in `out_dtype` (f32 by default, since accumulation
    and bias are f32).  Set slice_output=False to get the padded (M, N_pad)
    slab and skip the extra post-kernel slice pass.
    """
    m, k = x.shape
    k_pad, n_pad = w_kn.shape

    # Align dtypes with the prepped weight (bf16 MXU path by default).
    x = x.astype(w_kn.dtype)
    if k_pad != k:
        x = jnp.pad(x, ((0, 0), (0, k_pad - k)))   # zero K columns: no-op in dot

    # M tiling: bound the tile and zero-pad M so it always divides.
    tm_eff = m if m <= tm else tm
    m_pad = _round_up(m, tm_eff)
    if m_pad != m:
        x = jnp.pad(x, ((0, m_pad - m), (0, 0)))

    tn_eff = _pick_tile(n_pad, tn, _LANE)   # n_pad multiple of 128 -> always divides
    tk_eff = _pick_tile(k_pad, tk, _LANE)   # k_pad multiple of 128 when > 128

    cparams = pltpu.CompilerParams(
        # 48 MiB: fits v7x's 64 MiB VMEM with headroom; plenty on v5e/v6e.
        vmem_limit_bytes=48 * 1024 * 1024,
        dimension_semantics=(
            ("parallel",) if (tk_eff == k_pad and tn_eff == n_pad)
            else ("parallel", "parallel", "arbitrary")
        ),
    )

    if tk_eff == k_pad and tn_eff == n_pad:
        # --- small-K fast path: single K step, resident weight & bias -------
        grid = (m_pad // tm_eff,)
        out = pl.pallas_call(
            _small_kernel,
            out_shape=jax.ShapeDtypeStruct((m_pad, n_pad), out_dtype),
            grid_spec=pltpu.PrefetchScalarGridSpec(
                num_scalar_prefetch=0,
                grid=grid,
                in_specs=[
                    pl.BlockSpec((tm_eff, k_pad), lambda i: (i, 0)),   # x tile
                    pl.BlockSpec((k_pad, n_pad), lambda i: (0, 0)),    # W resident
                    pl.BlockSpec((1, n_pad), lambda i: (0, 0)),        # bias resident
                ],
                out_specs=pl.BlockSpec((tm_eff, n_pad), lambda i: (i, 0)),
            ),
            compiler_params=cparams,
        )(x, w_kn, b_1n)
    else:
        # --- general tiled path with f32 VMEM accumulator -------------------
        grid = (m_pad // tm_eff, n_pad // tn_eff, k_pad // tk_eff)
        out = pl.pallas_call(
            _tiled_kernel,
            out_shape=jax.ShapeDtypeStruct((m_pad, n_pad), out_dtype),
            grid_spec=pltpu.PrefetchScalarGridSpec(
                num_scalar_prefetch=0,
                grid=grid,
                in_specs=[
                    pl.BlockSpec((tm_eff, tk_eff), lambda i, j, kk: (i, kk)),
                    pl.BlockSpec((tk_eff, tn_eff), lambda i, j, kk: (kk, j)),
                    pl.BlockSpec((1, tn_eff), lambda i, j, kk: (0, j)),
                ],
                out_specs=pl.BlockSpec((tm_eff, tn_eff), lambda i, j, kk: (i, j)),
                scratch_shapes=[pltpu.VMEM((tm_eff, tn_eff), jnp.float32)],
            ),
            compiler_params=cparams,
        )(x, w_kn, b_1n)

    if m_pad != m:
        out = out[:m]
    if slice_output and out_dim != n_pad:
        out = out[:, :out_dim]
    return out


if __name__ == "__main__":
    # Small shapes consistent with the module: Linear(input_dim=32, output_dim=64)
    batch, input_dim, output_dim = 8, 32, 64

    key = jax.random.PRNGKey(0)
    kx, kw, kb = jax.random.split(key, 3)

    # Deterministic synthetic parameters (PyTorch-style uniform init bound).
    bound = 1.0 / (input_dim ** 0.5)
    weight = jax.random.uniform(kw, (output_dim, input_dim),
                                minval=-bound, maxval=bound, dtype=jnp.float32)
    bias = jax.random.uniform(kb, (output_dim,),
                              minval=-bound, maxval=bound, dtype=jnp.float32)
    x = jax.random.normal(kx, (batch, input_dim), dtype=jnp.float32)

    # One-time parameter prep (transpose + lane-pad + bf16), then the hot call.
    w_kn, b_1n, n_logical = prepare_aggregation_params(weight, bias,
                                                       dtype=jnp.bfloat16)
    out = aggregation_forward(x, w_kn, b_1n, n_logical)
    out = jax.block_until_ready(out)

    # Reference check: same math as nn.Linear + ReLU with the same bf16 operand
    # rounding (kernel accumulates in f32), plus a loose check vs full f32.
    x_b = x.astype(jnp.bfloat16).astype(jnp.float32)
    w_b = weight.astype(jnp.bfloat16).astype(jnp.float32)
    ref_bf16 = jnp.maximum(x_b @ w_b.T + bias, 0.0)
    ref_f32 = jnp.maximum(x @ weight.T + bias, 0.0)

    assert out.shape == (batch, output_dim)
    assert jnp.allclose(out, ref_bf16, atol=1e-4, rtol=1e-3), "mismatch vs bf16 ref"
    assert jnp.allclose(out, ref_f32, atol=5e-2, rtol=5e-2), "mismatch vs f32 ref"

    print("KERNEL_OK")
</pallas_src>

<mosaic_0001>
module attributes {stable_mosaic.version = 11 : i64} {
  func.func @_small_kernel(%arg0: i32, %arg1: memref<8x32xbf16, #tpu.memory_space<vmem>>, %arg2: memref<32x128xbf16, #tpu.memory_space<vmem>>, %arg3: memref<1x128xf32, #tpu.memory_space<vmem>>, %arg4: memref<8x128xf32, #tpu.memory_space<vmem>>) attributes {dimension_semantics = [#tpu.dimension_semantics<parallel>], iteration_bounds = array<i64: 1>, scalar_prefetch = 0 : i64, scratch_operands = 0 : i64, tpu.core_type = #tpu.core_type<tc>, window_params = [{transform_indices = @transform_0, window_bounds = array<i64: 8, 32>}, {pipeline_mode = #tpu.pipeline_mode<synchronous>, transform_indices = @transform_1, window_bounds = array<i64: 32, 128>}, {pipeline_mode = #tpu.pipeline_mode<synchronous>, transform_indices = @transform_2, window_bounds = array<i64: 1, 128>}, {transform_indices = @transform_3, window_bounds = array<i64: 8, 128>}]} {
    %c0 = arith.constant 0 : index
    %c0_0 = arith.constant 0 : index
    %0 = vector.load %arg1[%c0, %c0_0] : memref<8x32xbf16, #tpu.memory_space<vmem>>, vector<8x32xbf16>
    %c0_1 = arith.constant 0 : index
    %c0_2 = arith.constant 0 : index
    %1 = vector.load %arg2[%c0_1, %c0_2] : memref<32x128xbf16, #tpu.memory_space<vmem>>, vector<32x128xbf16>
    %cst = arith.constant dense<0.000000e+00> : vector<8x128xf32>
    %2 = tpu.matmul %0, %1, %cst {dimension_numbers = #tpu.dot_dimension_numbers<[1], [0], [0], [1], [0, 0, 1, 1], [], []>} : vector<8x32xbf16>, vector<32x128xbf16>, vector<8x128xf32> -> vector<8x128xf32>
    %c0_3 = arith.constant 0 : index
    %c0_4 = arith.constant 0 : index
    %3 = vector.load %arg3[%c0_3, %c0_4] : memref<1x128xf32, #tpu.memory_space<vmem>>, vector<1x128xf32>
    %4 = vector.broadcast %3 : vector<1x128xf32> to vector<8x128xf32>
    %5 = arith.addf %2, %4 : vector<8x128xf32>
    %cst_5 = arith.constant 0.000000e+00 : f32
    %6 = vector.broadcast %cst_5 : f32 to vector<8x128xf32>
    %7 = arith.maximumf %5, %6 : vector<8x128xf32>
    %c0_6 = arith.constant 0 : index
    %c0_7 = arith.constant 0 : index
    %8 = vector.load %arg4[%c0_6, %c0_7] : memref<8x128xf32, #tpu.memory_space<vmem>>, vector<8x128xf32>
    tpu.vector_store %arg4[%c0_6, %c0_7], %7 {strides = array<i32>} : memref<8x128xf32, #tpu.memory_space<vmem>>, vector<8x128xf32>,
    return
  }
  func.func @transform_0(%arg0: i32) -> (i32, i32) {
    %c0_i32 = arith.constant 0 : i32
    %c0_i32_0 = arith.constant 0 : i32
    return %arg0, %c0_i32 : i32, i32
  }
  func.func @transform_1(%arg0: i32) -> (i32, i32) {
    %c0_i32 = arith.constant 0 : i32
    %c0_i32_0 = arith.constant 0 : i32
    %c0_i32_1 = arith.constant 0 : i32
    return %c0_i32, %c0_i32_0 : i32, i32
  }
  func.func @transform_2(%arg0: i32) -> (i32, i32) {
    %c0_i32 = arith.constant 0 : i32
    %c0_i32_0 = arith.constant 0 : i32
    %c0_i32_1 = arith.constant 0 : i32
    return %c0_i32, %c0_i32_0 : i32, i32
  }
  func.func @transform_3(%arg0: i32) -> (i32, i32) {
    %c0_i32 = arith.constant 0 : i32
    %c0_i32_0 = arith.constant 0 : i32
    return %arg0, %c0_i32 : i32, i32
  }
}

</mosaic_0001>

<llo_original>
// kernel: aggregation_forward.1
$region0: #{aggregation_forward.1}
  #allocation0 [shape = 'u32[]', space=smem, size = 0x4, offset = 0x4, fixed_abs, tag = 'smem constant byte address 0x4 - core index']
  #allocation1 [shape = 'u32[144,128]{1,0:T(1,128)}', space=vmem, size = 0x12000, scoped, tag = 'internal scratch']
  %s0 = inlined_call_operand.vmem [shape: bf16[8,32], index: 0, kind: input, shape index: {}]
  %s1 = inlined_call_operand.hbm [shape: bf16[32,128], index: 1, kind: input, shape index: {}]
  %s2 = inlined_call_operand.vmem [shape: f32[1,128], index: 2, kind: input, shape index: {}]
  %s3 = inlined_call_operand.hbm [shape: f32[8,128], index: 3, kind: output, shape index: {}]
  %s4 = sld [smem:[#allocation0]]
  $region26: #{aggregation_forward.1} parent=0
    _
  %s6 = ssub.s32 1, %s4
  %s7 = scalar_select 0, %s6, %s4
  $region1: #{aggregation_forward.1} parent=0
    #allocation2 [shape = 'u8[8192]{0}', space=vmem, size = 0x2000, scoped, tag = 'input window, operand 1, single buffered']
    #allocation3 [shape = 's32[1]{0}', space=sflag, size = 0x4, scoped, tag = 'scoped memory for aggregation_forward.1']
    #allocation4 [shape = 's32[1]{0}', space=sflag, size = 0x4, scoped, tag = 'scoped memory for aggregation_forward.1']
    #allocation5 [shape = 'u8[4096]{0}', space=vmem, size = 0x1000, scoped, tag = 'output window, operand 0, single buffered']
    %8 = vsyncpa [#allocation3], 0
    %9 = vsyncpa [#allocation4], 0
    // Predicated region
    $region2: #{aggregation_forward.1} parent=1 // pred_check
      _
    $region3: #{aggregation_forward.1} parent=1 // pred_check_branch
      %11 = sbr.rel (0) target = $region5
    $region4: #{aggregation_forward.1} parent=1 // pred_region
      _
    $region5: #{aggregation_forward.1} parent=1 // pred_fallthru
      _
    // Predicated region
    $region6: #{aggregation_forward.1} parent=1 // pred_check
      _
    $region7: #{aggregation_forward.1} parent=1 // pred_check_branch
      %13 = sbr.rel (0) target = $region9
    $region8: #{aggregation_forward.1} parent=1 // pred_region
      %s15 = ssub.s32 256, 256
      %16 = vsyncadd [#allocation3], %s15
      %s17 = sshll.u32 [#allocation2], 4
      %s18 = int_to_ptr.vmem [resolvable:$true] %s17
      %23 = dma.hbm_to_vmem [thread:$0]  %s1, 256, %s18, [#allocation3], 64, 64, 4
    $region9: #{aggregation_forward.1} parent=1 // pred_fallthru
      _
    // Predicated region
    $region10: #{aggregation_forward.1} parent=1 // pred_check
      _
    $region11: #{aggregation_forward.1} parent=1 // pred_check_branch
      %25 = sbr.rel (0) target = $region13
    $region12: #{aggregation_forward.1} parent=1 // pred_region
      _
    $region13: #{aggregation_forward.1} parent=1 // pred_fallthru
      _
    // Predicated region
    $region14: #{aggregation_forward.1} parent=1 // pred_check
      _
    $region15: #{aggregation_forward.1} parent=1 // pred_check_branch
      %27 = sbr.rel (0) target = $region17
    $region16: #{aggregation_forward.1} parent=1 // pred_region
      %28 = dma.done [#allocation3], 256
    $region17: #{aggregation_forward.1} parent=1 // pred_fallthru
      _
    %v30 = vld [vmem:[%s0] sm:$0xf]
    %v31 = vld [vmem:[#allocation2] sm:$0xf]
    %v32 = vld [vmem:[#allocation2 + $0x4] sm:$0xf]
    %v33 = vld [vmem:[#allocation2 + $0x8] sm:$0xf]
    %v34 = vld [vmem:[#allocation2 + $0xc] sm:$0xf]
    %v35 = vld [vmem:[%s2] sm:$0x1]
    %v37 = vlaneseq
    %v38 = vshrl.u32 %v37, 7
    %v39 = vsub.s32 0, %v38
    %v40 = vrot.slane %v35, %v39
    %v46 = vunpack.c.l.b16 %v31
    %v47 = vunpack.c.l.b16 %v32
    %v48 = vunpack.c.l.b16 %v33
    %v49 = vunpack.c.l.b16 %v34
    %v50 = vpack.c.b16 %v47, %v46
    %v51 = vpack.c.b16 %v49, %v48
    %vm54 = vcmask 261120
    %v56 = vsel %vm54, %v30, 0
    %58 = vmatprep.subr.bf16.mxu0 0
    %59 = vmatpush1.bf16.msra.mxu0 %v50
    %60 = vmatprep.subr.bf16.mxu0 0
    %61 = vmatpush1.bf16.msra.mxu0 %v51
    %62 = vmatprep.subr.bf16.mxu0 0
    %63 = vmatpush1.bf16.msra.mxu0 0
    %64 = vmatprep.subr.bf16.mxu0 0
    %65 = vmatpush1.bf16.msra.mxu0 0
    %66 = vmatprep.subr.bf16.mxu0 0
    %67 = vmatpush1.bf16.msra.mxu0 0
    %68 = vmatprep.subr.bf16.mxu0 0
    %69 = vmatpush1.bf16.msra.mxu0 0
    %70 = vmatprep.subr.bf16.mxu0 0
    %71 = vmatpush1.bf16.msra.mxu0 0
    %72 = vmatprep.subr.bf16.mxu0 0
    %73 = vmatpush1.bf16.msra.mxu0 0
    %74 = vmatprep.subr.bf16.mxu0 0
    %75 = vmatpush1.bf16.msra.mxu0 0
    %76 = vmatprep.subr.bf16.mxu0 0
    %77 = vmatpush1.bf16.msra.mxu0 0
    %78 = vmatprep.subr.bf16.mxu0 0
    %79 = vmatpush1.bf16.msra.mxu0 0
    %80 = vmatprep.subr.bf16.mxu0 0
    %81 = vmatpush1.bf16.msra.mxu0 0
    %82 = vmatprep.subr.bf16.mxu0 0
    %83 = vmatpush1.bf16.msra.mxu0 0
    %84 = vmatprep.subr.bf16.mxu0 0
    %85 = vmatpush1.bf16.msra.mxu0 0
    %86 = vmatprep.subr.bf16.mxu0 0
    %87 = vmatpush1.bf16.msra.mxu0 0
    %88 = vmatprep.subr.bf16.mxu0 0
    %89 = vmatpush1.bf16.msra.mxu0 0
    %90 = vmatprep.mubr.bf16.mxu0 0
    %91 = vmatmul.mubr.bf16.gmra.mrb[0].mxu0 %v56
    %v92 = vpop.f32.mrb[0].mxu0
    %v93 = vadd.f32 %v40, %v92
    %v94 = vpop.f32.mrb[0].mxu0
    %v95 = vpop.f32.mrb[0].mxu0
    %v96 = vpop.f32.mrb[0].mxu0
    %97 = vdwg.mxu0
    %v98 = vmax.f32 %v93, 0.0
    %99 = vst [vmem:[#allocation5] sm:$0xff] %v98
    // Predicated region
    $region18: #{aggregation_forward.1} parent=1 // pred_check
      _
    $region19: #{aggregation_forward.1} parent=1 // pred_check_branch
      %101 = sbr.rel (0) target = $region21
    $region20: #{aggregation_forward.1} parent=1 // pred_region
      %s103 = ssub.s32 128, 128
      %104 = vsyncadd [#allocation4], %s103
      %s106 = sshll.u32 [#allocation5], 4
      %s107 = int_to_ptr.vmem [resolvable:$true] %s106
      %109 = dma.vmem_to_hbm [thread:$0]  %s107, 128, %s3, [#allocation4]
    $region21: #{aggregation_forward.1} parent=1 // pred_fallthru
      _
    // Predicated region
    $region22: #{aggregation_forward.1} parent=1 // pred_check
      _
    $region23: #{aggregation_forward.1} parent=1 // pred_check_branch
      %111 = sbr.rel (0) target = $region25
    $region24: #{aggregation_forward.1} parent=1 // pred_region
      %112 = dma.done [#allocation4], 128
    $region25: #{aggregation_forward.1} parent=1 // pred_fallthru
      _
    %113 = vsyncpa [#allocation3], 1
    %114 = vsyncpa [#allocation4], 1

</llo_original>
